<compile_context>
chip_gen: v6e
topology: v6e:2x2x1
jax: 0.10.0
libtpu: 0.0.40
codegen_flags: <defaults>
</compile_context>

<pallas_src>
import numpy as np
import jax
import jax.numpy as jnp
from jax import lax
from jax.experimental import pallas as pl
from jax.experimental.pallas import tpu as pltpu

IGNORE_INDEX = -100.0

# ------------------------- synthetic config -------------------------
BATCH = 2
ENTITY_LIMIT = 8          # == node count used here (max_size)
NODE_LIMIT = 8
HIDDEN = 32               # word_embed_hidden
DIS_SIZE = 16             # dis_size == abs_dis_size
RELATION_NUM = 8
RE_HIDDEN = 2 * (HIDDEN + DIS_SIZE)   # 96 (logical rel_linear1 width)
RH_PAD = 128              # padded rel hidden (lane-dense intermediate)
R_PAD = 128               # padded relation_num for the W2 MXU tile

BN = BATCH * ENTITY_LIMIT             # number of graph nodes (16)
BN_PAD = ((BN + 7) // 8) * 8          # sublane-aligned node-table rows (16)
DIS_PAD = 32                          # 19 distance buckets padded to 32 rows
K_SEL = 2 * BN_PAD + DIS_PAD          # one-hot selection width: [head | tail | dis] = 64

PAIR_TILE = 1024          # max pair tile; per-step VMEM stays < 200 KB even at 1024


# --------------------- Pallas kernel 1: per-node table ---------------------
def node_table_kernel(nodes_ref, wh_ref, bh_ref, wt_ref, bt_ref,
                      w1he_ref, w1te_ref, dis_ref, tbl_ref):
    """O(B*E) prologue: TBL = [ relu(n@Wh+bh)@W1_he ; relu(n@Wt+bt)@W1_te ; dis_table ]."""
    n = nodes_ref[...]
    he = jnp.maximum(jnp.dot(n, wh_ref[...], preferred_element_type=jnp.float32)
                     + bh_ref[...], 0.0)
    te = jnp.maximum(jnp.dot(n, wt_ref[...], preferred_element_type=jnp.float32)
                     + bt_ref[...], 0.0)
    tbl_ref[0:BN_PAD, :] = jnp.dot(he, w1he_ref[...],
                                   preferred_element_type=jnp.float32)
    tbl_ref[BN_PAD:2 * BN_PAD, :] = jnp.dot(te, w1te_ref[...],
                                            preferred_element_type=jnp.float32)
    tbl_ref[2 * BN_PAD:, :] = dis_ref[...]


def build_node_table(nodes_flat, kp):
    full = lambda i: (0, 0)
    return pl.pallas_call(
        node_table_kernel,
        out_shape=jax.ShapeDtypeStruct((K_SEL, RH_PAD), jnp.float32),
        grid_spec=pltpu.PrefetchScalarGridSpec(
            num_scalar_prefetch=0,
            grid=(1,),
            in_specs=[
                pl.BlockSpec((BN_PAD, HIDDEN), full),     # nodes            f32
                pl.BlockSpec((HIDDEN, HIDDEN), full),     # Wh               f32
                pl.BlockSpec((1, HIDDEN), full),          # bh               f32
                pl.BlockSpec((HIDDEN, HIDDEN), full),     # Wt               f32
                pl.BlockSpec((1, HIDDEN), full),          # bt               f32
                pl.BlockSpec((HIDDEN, RH_PAD), full),     # W1 rows for he   f32
                pl.BlockSpec((HIDDEN, RH_PAD), full),     # W1 rows for te   f32
                pl.BlockSpec((DIS_PAD, RH_PAD), full),    # distance table   f32
            ],
            out_specs=pl.BlockSpec((K_SEL, RH_PAD), full),
        ),
    )(nodes_flat, kp["wh"], kp["bh"], kp["wt"], kp["bt"],
      kp["w1_he"], kp["w1_te"], kp["dis_tbl"])


# --------------------- Pallas kernel 2: per-pair logits ---------------------
def pair_logits_kernel(selh_ref, selt_ref, seld_ref, msk_ref,
                       tbl_ref, b1_ref, w2_ref, b2_ref, out_ref):
    tm = out_ref.shape[0]

    # exact one-hot row selection: h1_pre = A[head] + C[tail] + D[dis_bucket] + b1
    lane = lax.broadcasted_iota(jnp.int32, (tm, K_SEL), 1)
    onehot = ((lane == selh_ref[...]) | (lane == selt_ref[...])
              | (lane == seld_ref[...])).astype(jnp.float32)
    h1 = jnp.dot(onehot, tbl_ref[...], preferred_element_type=jnp.float32) + b1_ref[...]
    h1 = jnp.maximum(h1, 0.0)                              # f32 elementwise (v5e-safe)

    # rel_linear2 on the MXU (bf16 operands, f32 accumulate); only 8 lanes are real
    logits = jnp.dot(h1.astype(jnp.bfloat16), w2_ref[...],
                     preferred_element_type=jnp.float32)
    out = logits[:, :RELATION_NUM] + b2_ref[...]

    # fused predict_re epilogue: IGNORE_INDEX fill for masked-out pairs
    out_ref[...] = jnp.where(msk_ref[...] > 0, out, IGNORE_INDEX)


def pair_relation_logits(sel_h, sel_t, sel_d, msk, tbl, kp, *, tm=None):
    """Selectors (P,) int32 + table -> (P, RELATION_NUM) f32 predict_re rows."""
    P = sel_h.shape[0]
    if tm is None:
        # >=2 grid steps so both v7x TensorCores get work; cap at PAIR_TILE for big P.
        tm = min(PAIR_TILE, max(8, (pl.cdiv(P, 2) // 8) * 8))
    P_pad = pl.cdiv(P, tm) * tm

    def prep(v):
        v = v.astype(jnp.int32)[:, None]
        if P_pad != P:                    # padded rows: mask=0 -> IGNORE_INDEX, sliced off
            v = jnp.pad(v, ((0, P_pad - P), (0, 0)))
        return v

    sel_h, sel_t, sel_d, msk = prep(sel_h), prep(sel_t), prep(sel_d), prep(msk)

    row = lambda i: (i, 0)
    full = lambda i: (0, 0)
    out = pl.pallas_call(
        pair_logits_kernel,
        out_shape=jax.ShapeDtypeStruct((P_pad, RELATION_NUM), jnp.float32),
        grid_spec=pltpu.PrefetchScalarGridSpec(
            num_scalar_prefetch=0,
            grid=(P_pad // tm,),
            in_specs=[
                pl.BlockSpec((tm, 1), row),               # head-node selector     int32
                pl.BlockSpec((tm, 1), row),               # tail-node selector     int32
                pl.BlockSpec((tm, 1), row),               # distance-bucket sel.   int32
                pl.BlockSpec((tm, 1), row),               # sample_mask            int32
                pl.BlockSpec((K_SEL, RH_PAD), full),      # [A; C; dis] table      f32
                pl.BlockSpec((1, RH_PAD), full),          # b1 (padded)            f32
                pl.BlockSpec((RH_PAD, R_PAD), full),      # W2 (padded)            bf16
                pl.BlockSpec((1, RELATION_NUM), full),    # b2                     f32
            ],
            out_specs=pl.BlockSpec((tm, RELATION_NUM), row),
        ),
        compiler_params=pltpu.CompilerParams(
            dimension_semantics=("parallel",)),
    )(sel_h, sel_t, sel_d, msk, tbl, kp["b1"], kp["w2"], kp["b2"])
    return out[:P]


# ------------------------- parameter init ---------------------------
def _init_linear(key, fan_in, fan_out):
    k1, k2 = jax.random.split(key)
    bound = 1.0 / np.sqrt(fan_in)
    w = jax.random.uniform(k1, (fan_in, fan_out), jnp.float32, -bound, bound)
    b = jax.random.uniform(k2, (1, fan_out), jnp.float32, -bound, bound)
    return w, b


def init_graph_layer_params(key):
    keys = jax.random.split(key, 6)
    wh, bh = _init_linear(keys[0], HIDDEN, HIDDEN)          # linear_head
    wt, bt = _init_linear(keys[1], HIDDEN, HIDDEN)          # linear_tail
    w1, b1 = _init_linear(keys[2], RE_HIDDEN, RE_HIDDEN)    # rel_linear1
    w2, b2 = _init_linear(keys[3], RE_HIDDEN, RELATION_NUM) # rel_linear2
    dis_embed = 0.02 * jax.random.normal(keys[4], (20, DIS_SIZE), jnp.float32)

    # standard DocRED-style dis2idx bucket table
    dis2idx = np.zeros(512, dtype=np.int32)
    dis2idx[1] = 1
    dis2idx[2:] = 2
    dis2idx[4:] = 3
    dis2idx[8:] = 4
    dis2idx[16:] = 5
    dis2idx[32:] = 6
    dis2idx[64:] = 7
    dis2idx[128:] = 8
    dis2idx[256:] = 9

    return {"wh": wh, "bh": bh, "wt": wt, "bt": bt,
            "w1": w1, "b1": b1, "w2": w2, "b2": b2,
            "dis_embed": dis_embed, "dis2idx": jnp.asarray(dis2idx)}


def pack_kernel_params(params):
    """One-time re-pack into the layouts the kernels consume."""
    H, D, RH, R = HIDDEN, DIS_SIZE, RE_HIDDEN, RELATION_NUM
    w1 = params["w1"]                                       # rows = [he | hd | te | td]
    w1_he = jnp.pad(w1[0:H],             ((0, 0), (0, RH_PAD - RH)))     # (32, 128)
    w1_te = jnp.pad(w1[H + D:2 * H + D], ((0, 0), (0, RH_PAD - RH)))     # (32, 128)
    w1_hd = w1[H:H + D]                                                  # (16, 96)
    w1_td = w1[2 * H + D:]                                               # (16, 96)
    b1 = jnp.pad(params["b1"], ((0, 0), (0, RH_PAD - RH)))               # (1, 128)

    # Distance contribution table: only 19 buckets exist (dis in [-9, 9]); both the head-
    # and tail-distance terms of rel_linear1 are folded, so the K=32 matmul disappears.
    d = jnp.arange(-9, 10)
    dis_tbl = (params["dis_embed"][d + 10] @ w1_hd
               + params["dis_embed"][10 - d] @ w1_td)                    # (19, 96) f32
    dis_tbl = jnp.pad(dis_tbl, ((0, DIS_PAD - 19), (0, RH_PAD - RH)))    # (32, 128)

    # rel_linear2 padded to 128x128 (zero rows/cols are exact no-ops), bf16 for the MXU
    w2 = jnp.pad(params["w2"], ((0, RH_PAD - RH), (0, R_PAD - R)))

    return {"wh": params["wh"], "bh": params["bh"],
            "wt": params["wt"], "bt": params["bt"],
            "w1_he": w1_he, "w1_te": w1_te, "dis_tbl": dis_tbl, "b1": b1,
            "w2": w2.astype(jnp.bfloat16), "b2": params["b2"]}


# ------------------------- forward (glue + kernels) -------------------
def graph_layer_forward(params, kparams, data, nodes_embed):
    B, E, H = nodes_embed.shape
    R = RELATION_NUM
    sample_mask = data["sample_mask"]          # (B, E, E) bool
    node_info = data["node_info"]              # (B, N, 3) int32

    # per-node prologue kernel: head/tail/distance contributions to rel_linear1
    nodes_flat = nodes_embed.reshape(B * E, H)
    nodes_flat = jnp.pad(nodes_flat, ((0, BN_PAD - B * E), (0, 0)))
    tbl = build_node_table(nodes_flat, kparams)              # (K_SEL, RH_PAD) f32

    # torch.where(pred_ind) replaced by the dense grid of all (b, h, t) pairs; only
    # 16 B/pair of int32 selectors are streamed to the pair kernel.
    b_g, h_g, t_g = jnp.meshgrid(jnp.arange(B), jnp.arange(E), jnp.arange(E),
                                 indexing="ij")
    b_f, h_f, t_f = b_g.reshape(-1), h_g.reshape(-1), t_g.reshape(-1)

    # use_distance branch (|delta| explicitly clipped to the dis2idx table size)
    delta = node_info[b_f, h_f, 2] - node_info[b_f, t_f, 2]
    bucket = params["dis2idx"][jnp.clip(jnp.abs(delta), 0, 511)]
    dis = jnp.where(delta > 0, bucket, -bucket)              # in [-9, 9]

    sel_h = b_f * E + h_f                                    # table rows [0, BN)
    sel_t = BN_PAD + b_f * E + t_f                           # table rows [BN_PAD, ...)
    sel_d = 2 * BN_PAD + dis + 9                             # table rows [2*BN_PAD, ...)
    msk = sample_mask.reshape(-1).astype(jnp.int32)

    predict_re = pair_relation_logits(sel_h, sel_t, sel_d, msk, tbl,
                                      kparams).reshape(B, E, E, R)

    # TODO(synk): Decoder not provided in source; seq_* stay zero-initialized.
    out_pre_seq = jnp.zeros((B, E, E, 11, NODE_LIMIT + 1), jnp.float32)
    out_tru_seq = jnp.zeros((B, E, E, 11), jnp.int32)
    out_mask_seq = jnp.zeros((B, E, E, 11), jnp.bool_)

    return {"predict_re": predict_re, "seq_pred": out_pre_seq,
            "seq_truth": out_tru_seq, "seq_mask": out_mask_seq}


# pure-f32 reference, faithful to the PyTorch forward (kernel uses one bf16 MXU stage)
def _reference_predict_re(params, nodes_embed, node_info, sample_mask):
    B, E, H = nodes_embed.shape
    R = RELATION_NUM
    b_g, h_g, t_g = jnp.meshgrid(jnp.arange(B), jnp.arange(E), jnp.arange(E),
                                 indexing="ij")
    b_f, h_f, t_f = b_g.reshape(-1), h_g.reshape(-1), t_g.reshape(-1)
    head_x = nodes_embed[b_f, h_f]
    tail_x = nodes_embed[b_f, t_f]
    delta = node_info[b_f, h_f, 2] - node_info[b_f, t_f, 2]
    bucket = params["dis2idx"][jnp.clip(jnp.abs(delta), 0, 511)]
    dis = jnp.where(delta > 0, bucket, -bucket)
    head_dis = params["dis_embed"][dis + 10]
    tail_dis = params["dis_embed"][-dis + 10]

    he = jnp.maximum(head_x @ params["wh"] + params["bh"], 0.0)
    te = jnp.maximum(tail_x @ params["wt"] + params["bt"], 0.0)
    rel = jnp.concatenate([he, head_dis, te, tail_dis], axis=-1)
    h1 = jnp.maximum(rel @ params["w1"] + params["b1"], 0.0)
    logits = (h1 @ params["w2"] + params["b2"]).reshape(B, E, E, R)
    return jnp.where(sample_mask[..., None], logits,
                     jnp.full_like(logits, IGNORE_INDEX))


# ------------------------------ main ---------------------------------
if __name__ == "__main__":
    key = jax.random.PRNGKey(0)
    k_param, k_nodes, k_mask, k_info = jax.random.split(key, 4)

    params = init_graph_layer_params(k_param)
    kparams = pack_kernel_params(params)

    nodes_embed = jax.random.normal(k_nodes, (BATCH, ENTITY_LIMIT, HIDDEN),
                                    jnp.float32)
    sample_mask = jax.random.bernoulli(k_mask, 0.5,
                                       (BATCH, ENTITY_LIMIT, ENTITY_LIMIT))
    node_info = jax.random.randint(k_info, (BATCH, ENTITY_LIMIT, 3), 0, 200,
                                   dtype=jnp.int32)

    data = {"sample_mask": sample_mask, "node_info": node_info}

    out = graph_layer_forward(params, kparams, data, nodes_embed)
    out = jax.block_until_ready(out)

    ref = _reference_predict_re(params, nodes_embed, node_info, sample_mask)
    np.testing.assert_allclose(np.asarray(out["predict_re"]),
                               np.asarray(ref), rtol=2e-2, atol=2e-2)
    print("KERNEL_OK")
</pallas_src>

<mosaic_0001>
module attributes {stable_mosaic.version = 11 : i64} {
  func.func @node_table_kernel(%arg0: i32, %arg1: memref<16x32xf32, #tpu.memory_space<vmem>>, %arg2: memref<32x32xf32, #tpu.memory_space<vmem>>, %arg3: memref<1x32xf32, #tpu.memory_space<vmem>>, %arg4: memref<32x32xf32, #tpu.memory_space<vmem>>, %arg5: memref<1x32xf32, #tpu.memory_space<vmem>>, %arg6: memref<32x128xf32, #tpu.memory_space<vmem>>, %arg7: memref<32x128xf32, #tpu.memory_space<vmem>>, %arg8: memref<32x128xf32, #tpu.memory_space<vmem>>, %arg9: memref<64x128xf32, #tpu.memory_space<vmem>>) attributes {dimension_semantics = [#tpu.dimension_semantics<arbitrary>], iteration_bounds = array<i64: 1>, scalar_prefetch = 0 : i64, scratch_operands = 0 : i64, tpu.core_type = #tpu.core_type<tc>, window_params = [{pipeline_mode = #tpu.pipeline_mode<synchronous>, transform_indices = @transform_0, window_bounds = array<i64: 16, 32>}, {pipeline_mode = #tpu.pipeline_mode<synchronous>, transform_indices = @transform_1, window_bounds = array<i64: 32, 32>}, {pipeline_mode = #tpu.pipeline_mode<synchronous>, transform_indices = @transform_2, window_bounds = array<i64: 1, 32>}, {pipeline_mode = #tpu.pipeline_mode<synchronous>, transform_indices = @transform_3, window_bounds = array<i64: 32, 32>}, {pipeline_mode = #tpu.pipeline_mode<synchronous>, transform_indices = @transform_4, window_bounds = array<i64: 1, 32>}, {pipeline_mode = #tpu.pipeline_mode<synchronous>, transform_indices = @transform_5, window_bounds = array<i64: 32, 128>}, {pipeline_mode = #tpu.pipeline_mode<synchronous>, transform_indices = @transform_6, window_bounds = array<i64: 32, 128>}, {pipeline_mode = #tpu.pipeline_mode<synchronous>, transform_indices = @transform_7, window_bounds = array<i64: 32, 128>}, {pipeline_mode = #tpu.pipeline_mode<synchronous>, transform_indices = @transform_8, window_bounds = array<i64: 64, 128>}]} {
    %c0 = arith.constant 0 : index
    %c0_0 = arith.constant 0 : index
    %0 = vector.load %arg1[%c0, %c0_0] : memref<16x32xf32, #tpu.memory_space<vmem>>, vector<16x32xf32>
    %c0_1 = arith.constant 0 : index
    %c0_2 = arith.constant 0 : index
    %1 = vector.load %arg2[%c0_1, %c0_2] : memref<32x32xf32, #tpu.memory_space<vmem>>, vector<32x32xf32>
    %cst = arith.constant dense<0.000000e+00> : vector<16x32xf32>
    %2 = tpu.matmul %0, %1, %cst {dimension_numbers = #tpu.dot_dimension_numbers<[1], [0], [0], [1], [0, 0, 1, 1], [], []>} : vector<16x32xf32>, vector<32x32xf32>, vector<16x32xf32> -> vector<16x32xf32>
    %c0_3 = arith.constant 0 : index
    %c0_4 = arith.constant 0 : index
    %3 = vector.load %arg3[%c0_3, %c0_4] : memref<1x32xf32, #tpu.memory_space<vmem>>, vector<1x32xf32>
    %4 = vector.broadcast %3 : vector<1x32xf32> to vector<16x32xf32>
    %5 = arith.addf %2, %4 : vector<16x32xf32>
    %cst_5 = arith.constant 0.000000e+00 : f32
    %6 = vector.broadcast %cst_5 : f32 to vector<16x32xf32>
    %7 = arith.maximumf %5, %6 : vector<16x32xf32>
    %c0_6 = arith.constant 0 : index
    %c0_7 = arith.constant 0 : index
    %8 = vector.load %arg4[%c0_6, %c0_7] : memref<32x32xf32, #tpu.memory_space<vmem>>, vector<32x32xf32>
    %cst_8 = arith.constant dense<0.000000e+00> : vector<16x32xf32>
    %9 = tpu.matmul %0, %8, %cst_8 {dimension_numbers = #tpu.dot_dimension_numbers<[1], [0], [0], [1], [0, 0, 1, 1], [], []>} : vector<16x32xf32>, vector<32x32xf32>, vector<16x32xf32> -> vector<16x32xf32>
    %c0_9 = arith.constant 0 : index
    %c0_10 = arith.constant 0 : index
    %10 = vector.load %arg5[%c0_9, %c0_10] : memref<1x32xf32, #tpu.memory_space<vmem>>, vector<1x32xf32>
    %11 = vector.broadcast %10 : vector<1x32xf32> to vector<16x32xf32>
    %12 = arith.addf %9, %11 : vector<16x32xf32>
    %cst_11 = arith.constant 0.000000e+00 : f32
    %13 = vector.broadcast %cst_11 : f32 to vector<16x32xf32>
    %14 = arith.maximumf %12, %13 : vector<16x32xf32>
    %c0_12 = arith.constant 0 : index
    %c0_13 = arith.constant 0 : index
    %15 = vector.load %arg6[%c0_12, %c0_13] : memref<32x128xf32, #tpu.memory_space<vmem>>, vector<32x128xf32>
    %cst_14 = arith.constant dense<0.000000e+00> : vector<16x128xf32>
    %16 = tpu.matmul %7, %15, %cst_14 {dimension_numbers = #tpu.dot_dimension_numbers<[1], [0], [0], [1], [0, 0, 1, 1], [], []>} : vector<16x32xf32>, vector<32x128xf32>, vector<16x128xf32> -> vector<16x128xf32>
    %c0_15 = arith.constant 0 : index
    %c0_16 = arith.constant 0 : index
    %17 = vector.load %arg9[%c0_15, %c0_16] : memref<64x128xf32, #tpu.memory_space<vmem>>, vector<16x128xf32>
    tpu.vector_store %arg9[%c0_15, %c0_16], %16 {strides = array<i32>} : memref<64x128xf32, #tpu.memory_space<vmem>>, vector<16x128xf32>,
    %c0_17 = arith.constant 0 : index
    %c0_18 = arith.constant 0 : index
    %18 = vector.load %arg7[%c0_17, %c0_18] : memref<32x128xf32, #tpu.memory_space<vmem>>, vector<32x128xf32>
    %cst_19 = arith.constant dense<0.000000e+00> : vector<16x128xf32>
    %19 = tpu.matmul %14, %18, %cst_19 {dimension_numbers = #tpu.dot_dimension_numbers<[1], [0], [0], [1], [0, 0, 1, 1], [], []>} : vector<16x32xf32>, vector<32x128xf32>, vector<16x128xf32> -> vector<16x128xf32>
    %c16 = arith.constant 16 : index
    %c0_20 = arith.constant 0 : index
    %20 = vector.load %arg9[%c16, %c0_20] : memref<64x128xf32, #tpu.memory_space<vmem>>, vector<16x128xf32>
    tpu.vector_store %arg9[%c16, %c0_20], %19 {strides = array<i32>} : memref<64x128xf32, #tpu.memory_space<vmem>>, vector<16x128xf32>,
    %c0_21 = arith.constant 0 : index
    %c0_22 = arith.constant 0 : index
    %21 = vector.load %arg8[%c0_21, %c0_22] : memref<32x128xf32, #tpu.memory_space<vmem>>, vector<32x128xf32>
    %c32 = arith.constant 32 : index
    %c0_23 = arith.constant 0 : index
    %22 = vector.load %arg9[%c32, %c0_23] : memref<64x128xf32, #tpu.memory_space<vmem>>, vector<32x128xf32>
    tpu.vector_store %arg9[%c32, %c0_23], %21 {strides = array<i32>} : memref<64x128xf32, #tpu.memory_space<vmem>>, vector<32x128xf32>,
    return
  }
  func.func @transform_0(%arg0: i32) -> (i32, i32) {
    %c0_i32 = arith.constant 0 : i32
    %c0_i32_0 = arith.constant 0 : i32
    %c0_i32_1 = arith.constant 0 : i32
    return %c0_i32, %c0_i32_0 : i32, i32
  }
  func.func @transform_1(%arg0: i32) -> (i32, i32) {
    %c0_i32 = arith.constant 0 : i32
    %c0_i32_0 = arith.constant 0 : i32
    %c0_i32_1 = arith.constant 0 : i32
    return %c0_i32, %c0_i32_0 : i32, i32
  }
  func.func @transform_2(%arg0: i32) -> (i32, i32) {
    %c0_i32 = arith.constant 0 : i32
    %c0_i32_0 = arith.constant 0 : i32
    %c0_i32_1 = arith.constant 0 : i32
    return %c0_i32, %c0_i32_0 : i32, i32
  }
  func.func @transform_3(%arg0: i32) -> (i32, i32) {
    %c0_i32 = arith.constant 0 : i32
    %c0_i32_0 = arith.constant 0 : i32
    %c0_i32_1 = arith.constant 0 : i32
    return %c0_i32, %c0_i32_0 : i32, i32
  }
  func.func @transform_4(%arg0: i32) -> (i32, i32) {
    %c0_i32 = arith.constant 0 : i32
    %c0_i32_0 = arith.constant 0 : i32
    %c0_i32_1 = arith.constant 0 : i32
    return %c0_i32, %c0_i32_0 : i32, i32
  }
  func.func @transform_5(%arg0: i32) -> (i32, i32) {
    %c0_i32 = arith.constant 0 : i32
    %c0_i32_0 = arith.constant 0 : i32
    %c0_i32_1 = arith.constant 0 : i32
    return %c0_i32, %c0_i32_0 : i32, i32
  }
  func.func @transform_6(%arg0: i32) -> (i32, i32) {
    %c0_i32 = arith.constant 0 : i32
    %c0_i32_0 = arith.constant 0 : i32
    %c0_i32_1 = arith.constant 0 : i32
    return %c0_i32, %c0_i32_0 : i32, i32
  }
  func.func @transform_7(%arg0: i32) -> (i32, i32) {
    %c0_i32 = arith.constant 0 : i32
    %c0_i32_0 = arith.constant 0 : i32
    %c0_i32_1 = arith.constant 0 : i32
    return %c0_i32, %c0_i32_0 : i32, i32
  }
  func.func @transform_8(%arg0: i32) -> (i32, i32) {
    %c0_i32 = arith.constant 0 : i32
    %c0_i32_0 = arith.constant 0 : i32
    %c0_i32_1 = arith.constant 0 : i32
    return %c0_i32, %c0_i32_0 : i32, i32
  }
}

</mosaic_0001>

<llo_original>
// kernel: tpu_custom_call.1
$region0: #{tpu_custom_call.1}
  #allocation0 [shape = 'u32[]', space=smem, size = 0x4, offset = 0x4, fixed_abs, tag = 'smem constant byte address 0x4 - core index']
  #allocation1 [shape = 'u32[144,128]{1,0:T(1,128)}', space=vmem, size = 0x12000, scoped, tag = 'internal scratch']
  %s0 = inlined_call_operand.hbm [shape: f32[16,32], index: 0, kind: input, shape index: {}]
  %s1 = inlined_call_operand.hbm [shape: f32[32,32], index: 1, kind: input, shape index: {}]
  %s2 = inlined_call_operand.vmem [shape: f32[1,32], index: 2, kind: input, shape index: {}]
  %s3 = inlined_call_operand.hbm [shape: f32[32,32], index: 3, kind: input, shape index: {}]
  %s4 = inlined_call_operand.vmem [shape: f32[1,32], index: 4, kind: input, shape index: {}]
  %s5 = inlined_call_operand.hbm [shape: f32[32,128], index: 5, kind: input, shape index: {}]
  %s6 = inlined_call_operand.hbm [shape: f32[32,128], index: 6, kind: input, shape index: {}]
  %s7 = inlined_call_operand.hbm [shape: f32[32,128], index: 7, kind: input, shape index: {}]
  %s8 = inlined_call_operand.hbm [shape: f32[64,128], index: 8, kind: output, shape index: {}]
  %s9 = sld [smem:[#allocation0]]
  $region66: #{tpu_custom_call.1} parent=0
    _
  %s11 = ssub.s32 1, %s9
  %s12 = scalar_select 0, %s11, %s9
  $region1: #{tpu_custom_call.1} parent=0
    #allocation2 [shape = 'u8[8192]{0}', space=vmem, size = 0x2000, scoped, tag = 'input window, operand 0, single buffered']
    #allocation3 [shape = 's32[1]{0}', space=sflag, size = 0x4, scoped, tag = 'scoped memory for tpu_custom_call.1']
    #allocation4 [shape = 's32[1]{0}', space=sflag, size = 0x4, scoped, tag = 'scoped memory for tpu_custom_call.1']
    #allocation5 [shape = 'u8[16384]{0}', space=vmem, size = 0x4000, scoped, tag = 'input window, operand 1, single buffered']
    #allocation6 [shape = 's32[1]{0}', space=sflag, size = 0x4, scoped, tag = 'scoped memory for tpu_custom_call.1']
    #allocation7 [shape = 'u8[16384]{0}', space=vmem, size = 0x4000, scoped, tag = 'input window, operand 3, single buffered']
    #allocation8 [shape = 'u8[16384]{0}', space=vmem, size = 0x4000, scoped, tag = 'input window, operand 5, single buffered']
    #allocation9 [shape = 's32[1]{0}', space=sflag, size = 0x4, scoped, tag = 'scoped memory for tpu_custom_call.1']
    #allocation10 [shape = 'u8[16384]{0}', space=vmem, size = 0x4000, scoped, tag = 'input window, operand 6, single buffered']
    #allocation11 [shape = 'u8[16384]{0}', space=vmem, size = 0x4000, scoped, tag = 'input window, operand 7, single buffered']
    #allocation12 [shape = 's32[1]{0}', space=sflag, size = 0x4, scoped, tag = 'scoped memory for tpu_custom_call.1']
    #allocation13 [shape = 'u8[32768]{0}', space=vmem, size = 0x8000, scoped, tag = 'output window, operand 0, single buffered']
    %13 = vsyncpa [#allocation3], 0
    %14 = vsyncpa [#allocation6], 0
    %15 = vsyncpa [#allocation9], 0
    %16 = vsyncpa [#allocation12], 0
    %17 = vsyncpa [#allocation4], 0
    // Predicated region
    $region2: #{tpu_custom_call.1} parent=1 // pred_check
      _
    $region3: #{tpu_custom_call.1} parent=1 // pred_check_branch
      %19 = sbr.rel (0) target = $region5
    $region4: #{tpu_custom_call.1} parent=1 // pred_region
      %s21 = ssub.s32 256, 256
      %22 = vsyncadd [#allocation3], %s21
      %s23 = sshll.u32 [#allocation2], 4
      %s24 = int_to_ptr.vmem [resolvable:$true] %s23
      %29 = dma.hbm_to_vmem [thread:$0]  %s0, 256, %s24, [#allocation3], 128, 128, 8
    $region5: #{tpu_custom_call.1} parent=1 // pred_fallthru
      _
    // Predicated region
    $region6: #{tpu_custom_call.1} parent=1 // pred_check
      _
    $region7: #{tpu_custom_call.1} parent=1 // pred_check_branch
      %31 = sbr.rel (0) target = $region9
    $region8: #{tpu_custom_call.1} parent=1 // pred_region
      %s33 = ssub.s32 512, 512
      %34 = vsyncadd [#allocation6], %s33
      %s35 = sshll.u32 [#allocation5], 4
      %s36 = int_to_ptr.vmem [resolvable:$true] %s35
      %41 = dma.hbm_to_vmem [thread:$0]  %s1, 512, %s36, [#allocation6], 128, 128, 8
    $region9: #{tpu_custom_call.1} parent=1 // pred_fallthru
      _
    // Predicated region
    $region10: #{tpu_custom_call.1} parent=1 // pred_check
      _
    $region11: #{tpu_custom_call.1} parent=1 // pred_check_branch
      %43 = sbr.rel (0) target = $region13
    $region12: #{tpu_custom_call.1} parent=1 // pred_region
      _
    $region13: #{tpu_custom_call.1} parent=1 // pred_fallthru
      _
    // Predicated region
    $region14: #{tpu_custom_call.1} parent=1 // pred_check
      _
    $region15: #{tpu_custom_call.1} parent=1 // pred_check_branch
      %45 = sbr.rel (0) target = $region17
    $region16: #{tpu_custom_call.1} parent=1 // pred_region
      %s47 = ssub.s32 512, 512
      %48 = vsyncadd [#allocation6], %s47
      %s49 = sshll.u32 [#allocation7], 4
      %s50 = int_to_ptr.vmem [resolvable:$true] %s49
      %55 = dma.hbm_to_vmem [thread:$0]  %s3, 512, %s50, [#allocation6], 128, 128, 8
    $region17: #{tpu_custom_call.1} parent=1 // pred_fallthru
      _
    // Predicated region
    $region18: #{tpu_custom_call.1} parent=1 // pred_check
      _
    $region19: #{tpu_custom_call.1} parent=1 // pred_check_branch
      %57 = sbr.rel (0) target = $region21
    $region20: #{tpu_custom_call.1} parent=1 // pred_region
      _
    $region21: #{tpu_custom_call.1} parent=1 // pred_fallthru
      _
    // Predicated region
    $region22: #{tpu_custom_call.1} parent=1 // pred_check
      _
    $region23: #{tpu_custom_call.1} parent=1 // pred_check_branch
      %59 = sbr.rel (0) target = $region25
    $region24: #{tpu_custom_call.1} parent=1 // pred_region
      %s61 = ssub.s32 512, 512
      %62 = vsyncadd [#allocation9], %s61
      %s63 = sshll.u32 [#allocation8], 4
      %s64 = int_to_ptr.vmem [resolvable:$true] %s63
      %69 = dma.hbm_to_vmem [thread:$0]  %s5, 512, %s64, [#allocation9], 128, 128, 8
    $region25: #{tpu_custom_call.1} parent=1 // pred_fallthru
      _
    // Predicated region
    $region26: #{tpu_custom_call.1} parent=1 // pred_check
      _
    $region27: #{tpu_custom_call.1} parent=1 // pred_check_branch
      %71 = sbr.rel (0) target = $region29
    $region28: #{tpu_custom_call.1} parent=1 // pred_region
      %s73 = ssub.s32 512, 512
      %74 = vsyncadd [#allocation9], %s73
      %s75 = sshll.u32 [#allocation10], 4
      %s76 = int_to_ptr.vmem [resolvable:$true] %s75
      %81 = dma.hbm_to_vmem [thread:$0]  %s6, 512, %s76, [#allocation9], 128, 128, 8
    $region29: #{tpu_custom_call.1} parent=1 // pred_fallthru
      _
    // Predicated region
    $region30: #{tpu_custom_call.1} parent=1 // pred_check
      _
    $region31: #{tpu_custom_call.1} parent=1 // pred_check_branch
      %83 = sbr.rel (0) target = $region33
    $region32: #{tpu_custom_call.1} parent=1 // pred_region
      %s85 = ssub.s32 512, 512
      %86 = vsyncadd [#allocation12], %s85
      %s87 = sshll.u32 [#allocation11], 4
      %s88 = int_to_ptr.vmem [resolvable:$true] %s87
      %93 = dma.hbm_to_vmem [thread:$0]  %s7, 512, %s88, [#allocation12], 128, 128, 8
    $region33: #{tpu_custom_call.1} parent=1 // pred_fallthru
      _
    // Predicated region
    $region34: #{tpu_custom_call.1} parent=1 // pred_check
      _
    $region35: #{tpu_custom_call.1} parent=1 // pred_check_branch
      %95 = sbr.rel (0) target = $region37
    $region36: #{tpu_custom_call.1} parent=1 // pred_region
      %96 = dma.done [#allocation3], 256
    $region37: #{tpu_custom_call.1} parent=1 // pred_fallthru
      _
    // Predicated region
    $region38: #{tpu_custom_call.1} parent=1 // pred_check
      _
    $region39: #{tpu_custom_call.1} parent=1 // pred_check_branch
      %98 = sbr.rel (0) target = $region41
    $region40: #{tpu_custom_call.1} parent=1 // pred_region
      %99 = dma.done [#allocation6], 512
    $region41: #{tpu_custom_call.1} parent=1 // pred_fallthru
      _
    // Predicated region
    $region42: #{tpu_custom_call.1} parent=1 // pred_check
      _
    $region43: #{tpu_custom_call.1} parent=1 // pred_check_branch
      %101 = sbr.rel (0) target = $region45
    $region44: #{tpu_custom_call.1} parent=1 // pred_region
      %102 = dma.done [#allocation6], 512
    $region45: #{tpu_custom_call.1} parent=1 // pred_fallthru
      _
    // Predicated region
    $region46: #{tpu_custom_call.1} parent=1 // pred_check
      _
    $region47: #{tpu_custom_call.1} parent=1 // pred_check_branch
      %104 = sbr.rel (0) target = $region49
    $region48: #{tpu_custom_call.1} parent=1 // pred_region
      %105 = dma.done [#allocation9], 512
    $region49: #{tpu_custom_call.1} parent=1 // pred_fallthru
      _
    // Predicated region
    $region50: #{tpu_custom_call.1} parent=1 // pred_check
      _
    $region51: #{tpu_custom_call.1} parent=1 // pred_check_branch
      %107 = sbr.rel (0) target = $region53
    $region52: #{tpu_custom_call.1} parent=1 // pred_region
      %108 = dma.done [#allocation9], 512
    $region53: #{tpu_custom_call.1} parent=1 // pred_fallthru
      _
    // Predicated region
    $region54: #{tpu_custom_call.1} parent=1 // pred_check
      _
    $region55: #{tpu_custom_call.1} parent=1 // pred_check_branch
      %110 = sbr.rel (0) target = $region57
    $region56: #{tpu_custom_call.1} parent=1 // pred_region
      %111 = dma.done [#allocation12], 512
    $region57: #{tpu_custom_call.1} parent=1 // pred_fallthru
      _
    %v112 = vld [vmem:[#allocation2] sm:$0xff]
    %v113 = vld [vmem:[#allocation2 + $0x8] sm:$0xff]
    %v114 = vld [vmem:[#allocation5] sm:$0xff]
    %v115 = vld [vmem:[#allocation5 + $0x8] sm:$0xff]
    %v116 = vld [vmem:[#allocation5 + $0x10] sm:$0xff]
    %v117 = vld [vmem:[#allocation5 + $0x18] sm:$0xff]
    %v118 = vld [vmem:[%s2] sm:$0x1]
    %v120 = vlaneseq
    %v121 = vshrl.u32 %v120, 7
    %v122 = vsub.s32 0, %v121
    %v123 = vrot.slane %v118, %v122
    %vm125 = vcmask 261120
    %v127 = vsel %vm125, %v112, 0
    %v130 = vsel %vm125, %v113, 0
    %132 = vmatprep.subr.mxu0 0.0
    %133 = vmatpush1.msra.mxu0 0.0
    %134 = vmatprep.subr.mxu0 0.0
    %135 = vmatpush1.msra.mxu0 0.0
    %136 = vmatprep.subr.mxu0 0.0
    %137 = vmatpush1.msra.mxu0 0.0
    %138 = vmatprep.subr.mxu0 0.0
    %139 = vmatpush1.msra.mxu0 0.0
    %140 = vmatprep.subr.mxu0 0.0
    %141 = vmatpush1.msra.mxu0 0.0
    %142 = vmatprep.subr.mxu0 0.0
    %143 = vmatpush1.msra.mxu0 0.0
    %144 = vmatprep.subr.mxu0 0.0
    %145 = vmatpush1.msra.mxu0 0.0
    %146 = vmatprep.subr.mxu0 0.0
    %147 = vmatpush1.msra.mxu0 0.0
    %148 = vmatprep.subr.mxu0 0.0
    %149 = vmatpush1.msra.mxu0 0.0
    %150 = vmatprep.subr.mxu0 0.0
    %151 = vmatpush1.msra.mxu0 0.0
    %152 = vmatprep.subr.mxu0 0.0
    %153 = vmatpush1.msra.mxu0 0.0
    %154 = vmatprep.subr.mxu0 0.0
    %155 = vmatpush1.msra.mxu0 0.0
    %156 = vmatprep.subr.mxu0 0.0
    %157 = vmatpush1.msra.mxu0 %v117
    %158 = vmatprep.subr.mxu0 0.0
    %159 = vmatpush1.msra.mxu0 %v116
    %160 = vmatprep.subr.mxu0 0.0
    %161 = vmatpush1.msra.mxu0 %v115
    %162 = vmatprep.subr.mxu0 0.0
    %163 = vmatpush1.msra.mxu0 %v114
    %164 = vmatprep.subr.mxu0 0.0
    %165 = vmatpush2.msra.mxu0 0.0
    %166 = vmatprep.subr.mxu0 0.0
    %167 = vmatpush2.msra.mxu0 0.0
    %168 = vmatprep.subr.mxu0 0.0
    %169 = vmatpush2.msra.mxu0 0.0
    %170 = vmatprep.subr.mxu0 0.0
    %171 = vmatpush2.msra.mxu0 0.0
    %172 = vmatprep.subr.mxu0 0.0
    %173 = vmatpush2.msra.mxu0 0.0
    %174 = vmatprep.subr.mxu0 0.0
    %175 = vmatpush2.msra.mxu0 0.0
    %176 = vmatprep.subr.mxu0 0.0
    %177 = vmatpush2.msra.mxu0 0.0
    %178 = vmatprep.subr.mxu0 0.0
    %179 = vmatpush2.msra.mxu0 0.0
    %180 = vmatprep.subr.mxu0 0.0
    %181 = vmatpush2.msra.mxu0 0.0
    %182 = vmatprep.subr.mxu0 0.0
    %183 = vmatpush2.msra.mxu0 0.0
    %184 = vmatprep.subr.mxu0 0.0
    %185 = vmatpush2.msra.mxu0 0.0
    %186 = vmatprep.subr.mxu0 0.0
    %187 = vmatpush2.msra.mxu0 0.0
    %188 = vmatprep.subr.mxu0 0.0
    %189 = vmatpush2.msra.mxu0 0.0
    %190 = vmatprep.subr.mxu0 0.0
    %191 = vmatpush2.msra.mxu0 0.0
    %192 = vmatprep.subr.mxu0 0.0
    %193 = vmatpush2.msra.mxu0 0.0
    %194 = vmatprep.subr.mxu0 0.0
    %195 = vmatpush2.msra.mxu0 0.0
    %196 = vmatprep.mubr.f32.mxu0 0.0
    %197 = vmatmul.mubr.f32.gmra.mxu0 %v127
    %v198 = vpop.f32.mrf.mxu0
    %v199 = vadd.f32 %v123, %v198
    %v200 = vpop.f32.mrf.mxu0
    %201 = vmatprep.mubr.f32.mxu0 0.0
    %202 = vmatmul.mubr.f32.gmra.mxu0 %v130
    %v203 = vpop.f32.mrf.mxu0
    %v204 = vadd.f32 %v123, %v203
    %v205 = vpop.f32.mrf.mxu0
    %206 = vdwg.mxu0
    %v207 = vmax.f32 %v199, 0.0
    %v208 = vmax.f32 %v204, 0.0
    %v209 = vld [vmem:[#allocation7] sm:$0xff]
    %v210 = vld [vmem:[#allocation7 + $0x8] sm:$0xff]
    %v211 = vld [vmem:[#allocation7 + $0x10] sm:$0xff]
    %v212 = vld [vmem:[#allocation7 + $0x18] sm:$0xff]
    %v213 = vld [vmem:[%s4] sm:$0x1]
    %v215 = vlaneseq
    %v216 = vshrl.u32 %v215, 7
    %v217 = vsub.s32 0, %v216
    %v218 = vrot.slane %v213, %v217
    %220 = vmatprep.subr.mxu0 0.0
    %221 = vmatpush1.msra.mxu0 0.0
    %222 = vmatprep.subr.mxu0 0.0
    %223 = vmatpush1.msra.mxu0 0.0
    %224 = vmatprep.subr.mxu0 0.0
    %225 = vmatpush1.msra.mxu0 0.0
    %226 = vmatprep.subr.mxu0 0.0
    %227 = vmatpush1.msra.mxu0 0.0
    %228 = vmatprep.subr.mxu0 0.0
    %229 = vmatpush1.msra.mxu0 0.0
    %230 = vmatprep.subr.mxu0 0.0
    %231 = vmatpush1.msra.mxu0 0.0
    %232 = vmatprep.subr.mxu0 0.0
    %233 = vmatpush1.msra.mxu0 0.0
    %234 = vmatprep.subr.mxu0 0.0
    %235 = vmatpush1.msra.mxu0 0.0
    %236 = vmatprep.subr.mxu0 0.0
    %237 = vmatpush1.msra.mxu0 0.0
    %238 = vmatprep.subr.mxu0 0.0
    %239 = vmatpush1.msra.mxu0 0.0
    %240 = vmatprep.subr.mxu0 0.0
    %241 = vmatpush1.msra.mxu0 0.0
    %242 = vmatprep.subr.mxu0 0.0
    %243 = vmatpush1.msra.mxu0 0.0
    %244 = vmatprep.subr.mxu0 0.0
    %245 = vmatpush1.msra.mxu0 %v212
    %246 = vmatprep.subr.mxu0 0.0
    %247 = vmatpush1.msra.mxu0 %v211
    %248 = vmatprep.subr.mxu0 0.0
    %249 = vmatpush1.msra.mxu0 %v210
    %250 = vmatprep.subr.mxu0 0.0
    %251 = vmatpush1.msra.mxu0 %v209
    %252 = vmatprep.subr.mxu0 0.0
    %253 = vmatpush2.msra.mxu0 0.0
    %254 = vmatprep.subr.mxu0 0.0
    %255 = vmatpush2.msra.mxu0 0.0
    %256 = vmatprep.subr.mxu0 0.0
    %257 = vmatpush2.msra.mxu0 0.0
    %258 = vmatprep.subr.mxu0 0.0
    %259 = vmatpush2.msra.mxu0 0.0
    %260 = vmatprep.subr.mxu0 0.0
    %261 = vmatpush2.msra.mxu0 0.0
    %262 = vmatprep.subr.mxu0 0.0
    %263 = vmatpush2.msra.mxu0 0.0
    %264 = vmatprep.subr.mxu0 0.0
    %265 = vmatpush2.msra.mxu0 0.0
    %266 = vmatprep.subr.mxu0 0.0
    %267 = vmatpush2.msra.mxu0 0.0
    %268 = vmatprep.subr.mxu0 0.0
    %269 = vmatpush2.msra.mxu0 0.0
    %270 = vmatprep.subr.mxu0 0.0
    %271 = vmatpush2.msra.mxu0 0.0
    %272 = vmatprep.subr.mxu0 0.0
    %273 = vmatpush2.msra.mxu0 0.0
    %274 = vmatprep.subr.mxu0 0.0
    %275 = vmatpush2.msra.mxu0 0.0
    %276 = vmatprep.subr.mxu0 0.0
    %277 = vmatpush2.msra.mxu0 0.0
    %278 = vmatprep.subr.mxu0 0.0
    %279 = vmatpush2.msra.mxu0 0.0
    %280 = vmatprep.subr.mxu0 0.0
    %281 = vmatpush2.msra.mxu0 0.0
    %282 = vmatprep.subr.mxu0 0.0
    %283 = vmatpush2.msra.mxu0 0.0
    %284 = vmatprep.mubr.f32.mxu0 0.0
    %285 = vmatmul.mubr.f32.gmra.mxu0 %v127
    %v286 = vpop.f32.mrf.mxu0
    %v287 = vadd.f32 %v218, %v286
    %v288 = vpop.f32.mrf.mxu0
    %289 = vmatprep.mubr.f32.mxu0 0.0
    %290 = vmatmul.mubr.f32.gmra.mxu0 %v130
    %v291 = vpop.f32.mrf.mxu0
    %v292 = vadd.f32 %v218, %v291
    %v293 = vpop.f32.mrf.mxu0
    %294 = vdwg.mxu0
    %v295 = vmax.f32 %v287, 0.0
    %v296 = vmax.f32 %v292, 0.0
    %v297 = vld [vmem:[#allocation8] sm:$0xff]
    %v298 = vld [vmem:[#allocation8 + $0x8] sm:$0xff]
    %v299 = vld [vmem:[#allocation8 + $0x10] sm:$0xff]
    %v300 = vld [vmem:[#allocation8 + $0x18] sm:$0xff]
    %v302 = vsel %vm125, %v207, 0
    %v305 = vsel %vm125, %v208, 0
    %307 = vmatprep.subr.mxu0 0.0
    %308 = vmatpush1.msra.mxu0 0.0
    %309 = vmatprep.subr.mxu0 0.0
    %310 = vmatpush1.msra.mxu0 0.0
    %311 = vmatprep.subr.mxu0 0.0
    %312 = vmatpush1.msra.mxu0 0.0
    %313 = vmatprep.subr.mxu0 0.0
    %314 = vmatpush1.msra.mxu0 0.0
    %315 = vmatprep.subr.mxu0 0.0
    %316 = vmatpush1.msra.mxu0 0.0
    %317 = vmatprep.subr.mxu0 0.0
    %318 = vmatpush1.msra.mxu0 0.0
    %319 = vmatprep.subr.mxu0 0.0
    %320 = vmatpush1.msra.mxu0 0.0
    %321 = vmatprep.subr.mxu0 0.0
    %322 = vmatpush1.msra.mxu0 0.0
    %323 = vmatprep.subr.mxu0 0.0
    %324 = vmatpush1.msra.mxu0 0.0
    %325 = vmatprep.subr.mxu0 0.0
    %326 = vmatpush1.msra.mxu0 0.0
    %327 = vmatprep.subr.mxu0 0.0
    %328 = vmatpush1.msra.mxu0 0.0
    %329 = vmatprep.subr.mxu0 0.0
    %330 = vmatpush1.msra.mxu0 0.0
    %331 = vmatprep.subr.mxu0 0.0
    %332 = vmatpush1.msra.mxu0 %v300
    %333 = vmatprep.subr.mxu0 0.0
    %334 = vmatpush1.msra.mxu0 %v299
    %335 = vmatprep.subr.mxu0 0.0
    %336 = vmatpush1.msra.mxu0 %v298
    %337 = vmatprep.subr.mxu0 0.0
    %338 = vmatpush1.msra.mxu0 %v297
    %339 = vmatprep.subr.mxu0 0.0
    %340 = vmatpush2.msra.mxu0 0.0
    %341 = vmatprep.subr.mxu0 0.0
    %342 = vmatpush2.msra.mxu0 0.0
    %343 = vmatprep.subr.mxu0 0.0
    %344 = vmatpush2.msra.mxu0 0.0
    %345 = vmatprep.subr.mxu0 0.0
    %346 = vmatpush2.msra.mxu0 0.0
    %347 = vmatprep.subr.mxu0 0.0
    %348 = vmatpush2.msra.mxu0 0.0
    %349 = vmatprep.subr.mxu0 0.0
    %350 = vmatpush2.msra.mxu0 0.0
    %351 = vmatprep.subr.mxu0 0.0
    %352 = vmatpush2.msra.mxu0 0.0
    %353 = vmatprep.subr.mxu0 0.0
    %354 = vmatpush2.msra.mxu0 0.0
    %355 = vmatprep.subr.mxu0 0.0
    %356 = vmatpush2.msra.mxu0 0.0
    %357 = vmatprep.subr.mxu0 0.0
    %358 = vmatpush2.msra.mxu0 0.0
    %359 = vmatprep.subr.mxu0 0.0
    %360 = vmatpush2.msra.mxu0 0.0
    %361 = vmatprep.subr.mxu0 0.0
    %362 = vmatpush2.msra.mxu0 0.0
    %363 = vmatprep.subr.mxu0 0.0
    %364 = vmatpush2.msra.mxu0 0.0
    %365 = vmatprep.subr.mxu0 0.0
    %366 = vmatpush2.msra.mxu0 0.0
    %367 = vmatprep.subr.mxu0 0.0
    %368 = vmatpush2.msra.mxu0 0.0
    %369 = vmatprep.subr.mxu0 0.0
    %370 = vmatpush2.msra.mxu0 0.0
    %371 = vmatprep.mubr.f32.mxu0 0.0
    %372 = vmatmul.mubr.f32.gmra.mxu0 %v302
    %v373 = vpop.f32.mrf.mxu0
    %v374 = vadd.f32 0.0, %v373
    %v375 = vpop.f32.mrf.mxu0
    %376 = vmatprep.mubr.f32.mxu0 0.0
    %377 = vmatmul.mubr.f32.gmra.mxu0 %v305
    %v378 = vpop.f32.mrf.mxu0
    %v379 = vadd.f32 0.0, %v378
    %v380 = vpop.f32.mrf.mxu0
    %381 = vdwg.mxu0
    %382 = vst [vmem:[#allocation13] sm:$0xff] %v374
    %383 = vst [vmem:[#allocation13 + $0x8] sm:$0xff] %v379
    %v384 = vld [vmem:[#allocation10] sm:$0xff]
    %v385 = vld [vmem:[#allocation10 + $0x8] sm:$0xff]
    %v386 = vld [vmem:[#allocation10 + $0x10] sm:$0xff]
    %v387 = vld [vmem:[#allocation10 + $0x18] sm:$0xff]
    %v389 = vsel %vm125, %v295, 0
    %v392 = vsel %vm125, %v296, 0
    %394 = vmatprep.subr.mxu0 0.0
    %395 = vmatpush1.msra.mxu0 0.0
    %396 = vmatprep.subr.mxu0 0.0
    %397 = vmatpush1.msra.mxu0 0.0
    %398 = vmatprep.subr.mxu0 0.0
    %399 = vmatpush1.msra.mxu0 0.0
    %400 = vmatprep.subr.mxu0 0.0
    %401 = vmatpush1.msra.mxu0 0.0
    %402 = vmatprep.subr.mxu0 0.0
    %403 = vmatpush1.msra.mxu0 0.0
    %404 = vmatprep.subr.mxu0 0.0
    %405 = vmatpush1.msra.mxu0 0.0
    %406 = vmatprep.subr.mxu0 0.0
    %407 = vmatpush1.msra.mxu0 0.0
    %408 = vmatprep.subr.mxu0 0.0
    %409 = vmatpush1.msra.mxu0 0.0
    %410 = vmatprep.subr.mxu0 0.0
    %411 = vmatpush1.msra.mxu0 0.0
    %412 = vmatprep.subr.mxu0 0.0
    %413 = vmatpush1.msra.mxu0 0.0
    %414 = vmatprep.subr.mxu0 0.0
    %415 = vmatpush1.msra.mxu0 0.0
    %416 = vmatprep.subr.mxu0 0.0
    %417 = vmatpush1.msra.mxu0 0.0
    %418 = vmatprep.subr.mxu0 0.0
    %419 = vmatpush1.msra.mxu0 %v387
    %420 = vmatprep.subr.mxu0 0.0
    %421 = vmatpush1.msra.mxu0 %v386
    %422 = vmatprep.subr.mxu0 0.0
    %423 = vmatpush1.msra.mxu0 %v385
    %424 = vmatprep.subr.mxu0 0.0
    %425 = vmatpush1.msra.mxu0 %v384
    %426 = vmatprep.subr.mxu0 0.0
    %427 = vmatpush2.msra.mxu0 0.0
    %428 = vmatprep.subr.mxu0 0.0
    %429 = vmatpush2.msra.mxu0 0.0
    %430 = vmatprep.subr.mxu0 0.0
    %431 = vmatpush2.msra.mxu0 0.0
    %432 = vmatprep.subr.mxu0 0.0
    %433 = vmatpush2.msra.mxu0 0.0
    %434 = vmatprep.subr.mxu0 0.0
    %435 = vmatpush2.msra.mxu0 0.0
    %436 = vmatprep.subr.mxu0 0.0
    %437 = vmatpush2.msra.mxu0 0.0
    %438 = vmatprep.subr.mxu0 0.0
    %439 = vmatpush2.msra.mxu0 0.0
    %440 = vmatprep.subr.mxu0 0.0
    %441 = vmatpush2.msra.mxu0 0.0
    %442 = vmatprep.subr.mxu0 0.0
    %443 = vmatpush2.msra.mxu0 0.0
    %444 = vmatprep.subr.mxu0 0.0
    %445 = vmatpush2.msra.mxu0 0.0
    %446 = vmatprep.subr.mxu0 0.0
    %447 = vmatpush2.msra.mxu0 0.0
    %448 = vmatprep.subr.mxu0 0.0
    %449 = vmatpush2.msra.mxu0 0.0
    %450 = vmatprep.subr.mxu0 0.0
    %451 = vmatpush2.msra.mxu0 0.0
    %452 = vmatprep.subr.mxu0 0.0
    %453 = vmatpush2.msra.mxu0 0.0
    %454 = vmatprep.subr.mxu0 0.0
    %455 = vmatpush2.msra.mxu0 0.0
    %456 = vmatprep.subr.mxu0 0.0
    %457 = vmatpush2.msra.mxu0 0.0
    %458 = vmatprep.mubr.f32.mxu0 0.0
    %459 = vmatmul.mubr.f32.gmra.mxu0 %v389
    %v460 = vpop.f32.mrf.mxu0
    %v461 = vadd.f32 0.0, %v460
    %v462 = vpop.f32.mrf.mxu0
    %463 = vmatprep.mubr.f32.mxu0 0.0
    %464 = vmatmul.mubr.f32.gmra.mxu0 %v392
    %v465 = vpop.f32.mrf.mxu0
    %v466 = vadd.f32 0.0, %v465
    %v467 = vpop.f32.mrf.mxu0
    %468 = vdwg.mxu0
    %469 = vst [vmem:[#allocation13 + $0x10] sm:$0xff] %v461
    %470 = vst [vmem:[#allocation13 + $0x18] sm:$0xff] %v466
    %v471 = vld [vmem:[#allocation11] sm:$0xff]
    %v472 = vld [vmem:[#allocation11 + $0x8] sm:$0xff]
    %v473 = vld [vmem:[#allocation11 + $0x10] sm:$0xff]
    %v474 = vld [vmem:[#allocation11 + $0x18] sm:$0xff]
    %475 = vst [vmem:[#allocation13 + $0x20] sm:$0xff] %v471
    %476 = vst [vmem:[#allocation13 + $0x28] sm:$0xff] %v472
    %477 = vst [vmem:[#allocation13 + $0x30] sm:$0xff] %v473
    %478 = vst [vmem:[#allocation13 + $0x38] sm:$0xff] %v474
    // Predicated region
    $region58: #{tpu_custom_call.1} parent=1 // pred_check
      _
    $region59: #{tpu_custom_call.1} parent=1 // pred_check_branch
      %480 = sbr.rel (0) target = $region61
    $region60: #{tpu_custom_call.1} parent=1 // pred_region
      %s482 = ssub.s32 1024, 1024
      %483 = vsyncadd [#allocation4], %s482
      %s484 = sshll.u32 [#allocation13], 4
      %s485 = int_to_ptr.vmem [resolvable:$true] %s484
      %490 = dma.vmem_to_hbm [thread:$0]  %s485, 1024, %s8, [#allocation4], 128, 128, 8
    $region61: #{tpu_custom_call.1} parent=1 // pred_fallthru
      _
    // Predicated region
    $region62: #{tpu_custom_call.1} parent=1 // pred_check
      _
    $region63: #{tpu_custom_call.1} parent=1 // pred_check_branch
      %492 = sbr.rel (0) target = $region65
    $region64: #{tpu_custom_call.1} parent=1 // pred_region
      %493 = dma.done [#allocation4], 1024
    $region65: #{tpu_custom_call.1} parent=1 // pred_fallthru
      _
    %494 = vsyncpa [#allocation3], 1
    %495 = vsyncpa [#allocation6], 1
    %496 = vsyncpa [#allocation9], 1
    %497 = vsyncpa [#allocation12], 1
    %498 = vsyncpa [#allocation4], 1

</llo_original>
